<compile_context>
chip_gen: v7x
topology: tpu7x:2x2x1
jax: 0.10.0
libtpu: 0.0.40
codegen_flags: <defaults>
</compile_context>

<pallas_src>
import functools

import jax
import jax.numpy as jnp
from jax.experimental import pallas as pl
from jax.experimental.pallas import tpu as pltpu


def _mil_body(x_ref, proj_ref, w_ref, pooled_ref, attn_ref, *, gated):
    x3 = x_ref[...]                            # (BB, N, D_in), f32
    bb, n, d_in = x3.shape
    x2 = x3.reshape(bb * n, d_in)              # one wide MXU matmul for all bags

    d_w = w_ref.shape[-1]

    # Single projection matmul; for the gated path proj_ref = [V | U].
    proj = jnp.dot(x2, proj_ref[...], preferred_element_type=jnp.float32)
    if gated:
        # h = tanh(x @ V) * sigmoid(x @ U)   (static lane slices of one result)
        h = jnp.tanh(proj[:, :d_w]) * jax.nn.sigmoid(proj[:, d_w:])
    else:
        h = jnp.tanh(proj)                     # (BB*N, D_w)

    h3 = h.reshape(bb, n, d_w)

    # scores = h @ w, computed as VPU multiply + lane reduce (w is (1, D_w)).
    scores = jnp.sum(h3 * w_ref[...], axis=-1)           # (BB, N)

    # Numerically-stable softmax over the instance axis (torch dim=1).
    m = jnp.max(scores, axis=-1, keepdims=True)          # (BB, 1)
    e = jnp.exp(scores - m)
    denom = jnp.sum(e, axis=-1, keepdims=True)
    attn = e * pl.reciprocal(denom, approx=True)         # (BB, N)

    attn_ref[...] = attn.astype(attn_ref.dtype)

    # pooled = sum_N x * attn  ->  batched MXU contraction over N.
    pooled = jnp.einsum('bqn,bnd->bqd', attn.reshape(bb, 1, n), x3,
                        preferred_element_type=jnp.float32)   # (BB, 1, D_in)
    pooled_ref[...] = pooled.reshape(bb, d_in).astype(pooled_ref.dtype)


def _make_kernel(gated):
    def kernel(x_ref, proj_ref, w_ref, pooled_ref, attn_ref):
        _mil_body(x_ref, proj_ref, w_ref, pooled_ref, attn_ref, gated=gated)
    return kernel


_KERNEL_GATED = _make_kernel(True)
_KERNEL_PLAIN = _make_kernel(False)


def _round_up(x, m):
    return (x + m - 1) // m * m


def _choose_block_batch(b, n, d_in):
    """Largest batch block that keeps the double-buffered x tile well inside
    the scoped VMEM budget, is a multiple of 8 sublanes, and doesn't over-pad
    a tiny batch."""
    per_bag_bytes = max(n * d_in * 4, 1)
    budget = 8 * 1024 * 1024                  # ~8 MiB per x block (x2 double-buffered)
    bb = max(8, (budget // per_bag_bytes) // 8 * 8)
    bb = min(bb, 64)                          # cap per-step work; keeps >=2 grid
    bb = min(bb, _round_up(b, 8))             # steps for realistic B (megacore)
    return bb


@functools.partial(jax.jit, static_argnames=("use_gated",))
def mil_attention_forward(x, v_w, w_w, u_w=None, *, use_gated=False):
    """x: (B, N, D_in) f32; v_w: (D_in, D_w); w_w: (D_w, 1); u_w: (D_in, D_w)."""
    B, N, D_in = x.shape
    D_w = v_w.shape[1]

    BB = _choose_block_batch(B, N, D_in)
    B_pad = _round_up(B, BB)
    if B_pad != B:
        # Zero-padded bags are harmless: scores are 0 -> uniform softmax,
        # pooled = 0; they are sliced off below.
        x = jnp.pad(x, ((0, B_pad - B), (0, 0), (0, 0)))

    w_row = w_w.reshape(1, D_w)               # lane-dense weight row

    if use_gated:
        proj_w = jnp.concatenate([v_w, u_w], axis=1)     # (D_in, 2*D_w)
        kernel = _KERNEL_GATED
    else:
        proj_w = v_w                                     # (D_in, D_w)
        kernel = _KERNEL_PLAIN
    proj_cols = proj_w.shape[1]

    in_specs = [
        pl.BlockSpec((BB, N, D_in), lambda b: (b, 0, 0)),       # x block
        pl.BlockSpec((D_in, proj_cols), lambda b: (0, 0)),      # [V | U] or V
        pl.BlockSpec((1, D_w), lambda b: (0, 0)),               # w row
    ]
    args = [x, proj_w, w_row]

    out_shape = (
        jax.ShapeDtypeStruct((B_pad, D_in), jnp.float32),       # pooled
        jax.ShapeDtypeStruct((B_pad, N), jnp.float32),          # attn (lane-dense)
    )
    out_specs = (
        pl.BlockSpec((BB, D_in), lambda b: (b, 0)),
        pl.BlockSpec((BB, N), lambda b: (b, 0)),
    )

    pooled, attn = pl.pallas_call(
        kernel,
        out_shape=out_shape,
        grid_spec=pltpu.PrefetchScalarGridSpec(
            num_scalar_prefetch=0,
            grid=(B_pad // BB,),
            in_specs=in_specs,
            out_specs=out_specs,
        ),
        compiler_params=pltpu.CompilerParams(
            dimension_semantics=("parallel",),
            # Raise the scoped VMEM limit (v5e default is only 16 MiB);
            # 32 MiB fits within physical VMEM on every generation incl. v7x.
            vmem_limit_bytes=32 * 1024 * 1024,
        ),
    )(*args)

    # Un-pad and restore the torch output layout (B, N, 1) for the weights.
    return pooled[:B], attn[:B].reshape(B, N, 1)


def xavier_uniform(key, shape, dtype=jnp.float32):
    fan_in, fan_out = shape[0], shape[1]
    limit = (6.0 / (fan_in + fan_out)) ** 0.5
    return jax.random.uniform(key, shape, dtype, minval=-limit, maxval=limit)


def reference_forward(x, v_w, w_w, u_w=None, use_gated=False):
    h = jnp.tanh(jnp.matmul(x, v_w))
    if use_gated:
        h = h * jax.nn.sigmoid(jnp.matmul(x, u_w))
    scores = jnp.matmul(h, w_w)                 # (B, N, 1)
    attn = jax.nn.softmax(scores, axis=1)
    pooled = jnp.sum(x * attn, axis=1)
    return pooled, attn


if __name__ == "__main__":
    # Small shapes consistent with the module: bags of N instances per batch.
    B, N, D_in, D_w = 2, 8, 32, 16

    key = jax.random.PRNGKey(0)
    kx, kv, kw, ku = jax.random.split(key, 4)

    x = jax.random.normal(kx, (B, N, D_in), jnp.float32)
    v_w = xavier_uniform(kv, (D_in, D_w))
    w_w = xavier_uniform(kw, (D_w, 1))
    u_w = xavier_uniform(ku, (D_in, D_w))

    # Gated path.
    pooled, attn = mil_attention_forward(x, v_w, w_w, u_w, use_gated=True)
    jax.block_until_ready((pooled, attn))
    ref_pooled, ref_attn = reference_forward(x, v_w, w_w, u_w, use_gated=True)
    assert pooled.shape == (B, D_in) and attn.shape == (B, N, 1)
    # approx=True reciprocal in the softmax -> slightly looser tolerance.
    assert jnp.allclose(pooled, ref_pooled, atol=5e-3, rtol=5e-3)
    assert jnp.allclose(attn, ref_attn, atol=5e-3, rtol=5e-3)

    # Non-gated path.
    p2, a2 = mil_attention_forward(x, v_w, w_w, use_gated=False)
    jax.block_until_ready((p2, a2))
    rp2, ra2 = reference_forward(x, v_w, w_w, use_gated=False)
    assert p2.shape == (B, D_in) and a2.shape == (B, N, 1)
    assert jnp.allclose(p2, rp2, atol=5e-3, rtol=5e-3)
    assert jnp.allclose(a2, ra2, atol=5e-3, rtol=5e-3)

    print("KERNEL_OK")
</pallas_src>

<mosaic_0001>
module attributes {stable_mosaic.version = 11 : i64} {
  func.func @kernel(%arg0: i32, %arg1: memref<8x8x32xf32, #tpu.memory_space<vmem>>, %arg2: memref<32x32xf32, #tpu.memory_space<vmem>>, %arg3: memref<1x16xf32, #tpu.memory_space<vmem>>, %arg4: memref<8x32xf32, #tpu.memory_space<vmem>>, %arg5: memref<8x8xf32, #tpu.memory_space<vmem>>) attributes {dimension_semantics = [#tpu.dimension_semantics<parallel>], iteration_bounds = array<i64: 1>, scalar_prefetch = 0 : i64, scratch_operands = 0 : i64, tpu.core_type = #tpu.core_type<tc>, window_params = [{transform_indices = @transform_0, window_bounds = array<i64: 8, 8, 32>}, {pipeline_mode = #tpu.pipeline_mode<synchronous>, transform_indices = @transform_1, window_bounds = array<i64: 32, 32>}, {pipeline_mode = #tpu.pipeline_mode<synchronous>, transform_indices = @transform_2, window_bounds = array<i64: 1, 16>}, {transform_indices = @transform_3, window_bounds = array<i64: 8, 32>}, {transform_indices = @transform_4, window_bounds = array<i64: 8, 8>}]} {
    %c0 = arith.constant 0 : index
    %c0_0 = arith.constant 0 : index
    %c0_1 = arith.constant 0 : index
    %0 = vector.load %arg1[%c0, %c0_0, %c0_1] : memref<8x8x32xf32, #tpu.memory_space<vmem>>, vector<8x8x32xf32>
    %1 = vector.shape_cast %0 : vector<8x8x32xf32> to vector<64x32xf32>
    %c0_2 = arith.constant 0 : index
    %c0_3 = arith.constant 0 : index
    %2 = vector.load %arg2[%c0_2, %c0_3] : memref<32x32xf32, #tpu.memory_space<vmem>>, vector<32x32xf32>
    %cst = arith.constant dense<0.000000e+00> : vector<64x32xf32>
    %3 = tpu.matmul %1, %2, %cst {dimension_numbers = #tpu.dot_dimension_numbers<[1], [0], [0], [1], [0, 0, 1, 1], [], []>} : vector<64x32xf32>, vector<32x32xf32>, vector<64x32xf32> -> vector<64x32xf32>
    %4 = vector.extract_strided_slice %3 {offsets = [0, 0], sizes = [64, 16], strides = [1, 1]} : vector<64x32xf32> to vector<64x16xf32>
    %5 = math.tanh %4 : vector<64x16xf32>
    %6 = vector.extract_strided_slice %3 {offsets = [0, 16], sizes = [64, 16], strides = [1, 1]} : vector<64x32xf32> to vector<64x16xf32>
    %7 = arith.negf %6 : vector<64x16xf32>
    %8 = math.exp %7 : vector<64x16xf32>
    %cst_4 = arith.constant 1.000000e+00 : f32
    %9 = vector.broadcast %cst_4 : f32 to vector<64x16xf32>
    %10 = arith.addf %9, %8 : vector<64x16xf32>
    %11 = arith.divf %9, %10 : vector<64x16xf32>
    %12 = arith.mulf %5, %11 : vector<64x16xf32>
    %13 = vector.shape_cast %12 : vector<64x16xf32> to vector<8x8x16xf32>
    %c0_5 = arith.constant 0 : index
    %c0_6 = arith.constant 0 : index
    %14 = vector.load %arg3[%c0_5, %c0_6] : memref<1x16xf32, #tpu.memory_space<vmem>>, vector<1x16xf32>
    %15 = vector.shape_cast %14 : vector<1x16xf32> to vector<1x1x16xf32>
    %16 = vector.broadcast %15 : vector<1x1x16xf32> to vector<8x8x16xf32>
    %17 = arith.mulf %13, %16 : vector<8x8x16xf32>
    %cst_7 = arith.constant dense<0.000000e+00> : vector<8x8xf32>
    %18 = vector.multi_reduction <add>, %17, %cst_7 [2] : vector<8x8x16xf32> to vector<8x8xf32>
    %cst_8 = arith.constant dense<0xFF800000> : vector<8xf32>
    %19 = vector.multi_reduction <maximumf>, %18, %cst_8 [1] : vector<8x8xf32> to vector<8xf32>
    %20 = vector.shape_cast %19 : vector<8xf32> to vector<8x1xf32>
    %21 = vector.broadcast %20 : vector<8x1xf32> to vector<8x8xf32>
    %22 = arith.subf %18, %21 : vector<8x8xf32>
    %23 = math.exp %22 : vector<8x8xf32>
    %cst_9 = arith.constant dense<0.000000e+00> : vector<8xf32>
    %24 = vector.multi_reduction <add>, %23, %cst_9 [1] : vector<8x8xf32> to vector<8xf32>
    %25 = vector.shape_cast %24 : vector<8xf32> to vector<8x1xf32>
    %26 = tpu.reciprocal %25 {approx = true} : vector<8x1xf32> -> vector<8x1xf32>
    %27 = vector.broadcast %26 : vector<8x1xf32> to vector<8x8xf32>
    %28 = arith.mulf %23, %27 : vector<8x8xf32>
    %c0_10 = arith.constant 0 : index
    %c0_11 = arith.constant 0 : index
    %29 = vector.load %arg5[%c0_10, %c0_11] : memref<8x8xf32, #tpu.memory_space<vmem>>, vector<8x8xf32>
    tpu.vector_store %arg5[%c0_10, %c0_11], %28 {strides = array<i32>} : memref<8x8xf32, #tpu.memory_space<vmem>>, vector<8x8xf32>,
    %30 = vector.shape_cast %28 : vector<8x8xf32> to vector<8x1x8xf32>
    "tpu.trace_start"() <{level = 10 : i32, message = "bqn,bnd->bqd"}> : () -> ()
    %cst_12 = arith.constant dense<0.000000e+00> : vector<8x1x32xf32>
    %31 = tpu.matmul %30, %0, %cst_12 {dimension_numbers = #tpu.dot_dimension_numbers<[2], [1], [1], [2], [0, 0, 0, 1, 1, 2], [0], [0]>} : vector<8x1x8xf32>, vector<8x8x32xf32>, vector<8x1x32xf32> -> vector<8x1x32xf32>
    "tpu.trace_stop"() : () -> ()
    %32 = vector.shape_cast %31 : vector<8x1x32xf32> to vector<8x32xf32>
    %c0_13 = arith.constant 0 : index
    %c0_14 = arith.constant 0 : index
    %33 = vector.load %arg4[%c0_13, %c0_14] : memref<8x32xf32, #tpu.memory_space<vmem>>, vector<8x32xf32>
    tpu.vector_store %arg4[%c0_13, %c0_14], %32 {strides = array<i32>} : memref<8x32xf32, #tpu.memory_space<vmem>>, vector<8x32xf32>,
    return
  }
  func.func @transform_0(%arg0: i32) -> (i32, i32, i32) {
    %c0_i32 = arith.constant 0 : i32
    %c0_i32_0 = arith.constant 0 : i32
    %c0_i32_1 = arith.constant 0 : i32
    return %arg0, %c0_i32, %c0_i32_0 : i32, i32, i32
  }
  func.func @transform_1(%arg0: i32) -> (i32, i32) {
    %c0_i32 = arith.constant 0 : i32
    %c0_i32_0 = arith.constant 0 : i32
    %c0_i32_1 = arith.constant 0 : i32
    return %c0_i32, %c0_i32_0 : i32, i32
  }
  func.func @transform_2(%arg0: i32) -> (i32, i32) {
    %c0_i32 = arith.constant 0 : i32
    %c0_i32_0 = arith.constant 0 : i32
    %c0_i32_1 = arith.constant 0 : i32
    return %c0_i32, %c0_i32_0 : i32, i32
  }
  func.func @transform_3(%arg0: i32) -> (i32, i32) {
    %c0_i32 = arith.constant 0 : i32
    %c0_i32_0 = arith.constant 0 : i32
    return %arg0, %c0_i32 : i32, i32
  }
  func.func @transform_4(%arg0: i32) -> (i32, i32) {
    %c0_i32 = arith.constant 0 : i32
    %c0_i32_0 = arith.constant 0 : i32
    return %arg0, %c0_i32 : i32, i32
  }
}

</mosaic_0001>

<llo_original>
// kernel: mil_attention_forward.1
$region0: #{mil_attention_forward.1}
  #allocation0 [shape = 'u32[]', space=smem, size = 0x4, offset = 0x4, fixed_abs, tag = 'smem constant byte address 0x4 - core index']
  #allocation1 [shape = 'u32[144,128]{1,0:T(1,128)}', space=vmem, size = 0x12000, scoped, tag = 'internal scratch']
  %s0 = inlined_call_operand.vmem [shape: f32[8,8,32], index: 0, kind: input, shape index: {}]
  %s1 = inlined_call_operand.vmem [shape: f32[32,32], index: 1, kind: input, shape index: {}]
  %s2 = inlined_call_operand.vmem [shape: f32[1,16], index: 2, kind: input, shape index: {}]
  %s3 = inlined_call_operand.vmem [shape: f32[8,32], index: 3, kind: output, shape index: {0}]
  %s4 = inlined_call_operand.vmem [shape: f32[8,8], index: 4, kind: output, shape index: {1}]
  %5 = xla_tuple %s3, %s4
  %s6 = sld [smem:[#allocation0]]
  $region30: #{mil_attention_forward.1} parent=0
    _
  %s8 = ssub.s32 1, %s6
  %s9 = scalar_select 0, %s8, %s6
  // Predicated region
  $region2: #{mil_attention_forward.1} parent=0 // pred_check
    _
  $region3: #{mil_attention_forward.1} parent=0 // pred_check_branch
    %11 = sbr.rel (0) target = $region5
  $region4: #{mil_attention_forward.1} parent=0 // pred_region
    _
  $region5: #{mil_attention_forward.1} parent=0 // pred_fallthru
    _
  // Predicated region
  $region6: #{mil_attention_forward.1} parent=0 // pred_check
    _
  $region7: #{mil_attention_forward.1} parent=0 // pred_check_branch
    %13 = sbr.rel (0) target = $region9
  $region8: #{mil_attention_forward.1} parent=0 // pred_region
    _
  $region9: #{mil_attention_forward.1} parent=0 // pred_fallthru
    _
  // Predicated region
  $region10: #{mil_attention_forward.1} parent=0 // pred_check
    _
  $region11: #{mil_attention_forward.1} parent=0 // pred_check_branch
    %15 = sbr.rel (0) target = $region13
  $region12: #{mil_attention_forward.1} parent=0 // pred_region
    _
  $region13: #{mil_attention_forward.1} parent=0 // pred_fallthru
    _
  %v16 = vld [vmem:[%s0] sm:$0xff]
  %v17 = vld [vmem:[%s0 + $0x8] sm:$0xff]
  %v18 = vld [vmem:[%s0 + $0x10] sm:$0xff]
  %v19 = vld [vmem:[%s0 + $0x18] sm:$0xff]
  %v20 = vld [vmem:[%s0 + $0x20] sm:$0xff]
  %v21 = vld [vmem:[%s0 + $0x28] sm:$0xff]
  %v22 = vld [vmem:[%s0 + $0x30] sm:$0xff]
  %v23 = vld [vmem:[%s0 + $0x38] sm:$0xff]
  %v24 = vld [vmem:[%s1] sm:$0xff]
  %v25 = vld [vmem:[%s1 + $0x8] sm:$0xff]
  %v26 = vld [vmem:[%s1 + $0x10] sm:$0xff]
  %v27 = vld [vmem:[%s1 + $0x18] sm:$0xff]
  %vm28 = vcmask 261120
  %v30 = vsel %vm28, %v16, 0
  %v33 = vsel %vm28, %v17, 0
  %v36 = vsel %vm28, %v18, 0
  %v39 = vsel %vm28, %v19, 0
  %v42 = vsel %vm28, %v20, 0
  %v45 = vsel %vm28, %v21, 0
  %v48 = vsel %vm28, %v22, 0
  %v51 = vsel %vm28, %v23, 0
  %53 = vmatprep.subr.mxu0 0.0
  %54 = vmatpush1.msra.mxu0 %v24
  %55 = vmatprep.subr.mxu0 0.0
  %56 = vmatpush1.msra.mxu0 %v25
  %57 = vmatprep.subr.mxu0 0.0
  %58 = vmatpush1.msra.mxu0 %v26
  %59 = vmatprep.subr.mxu0 0.0
  %60 = vmatpush1.msra.mxu0 %v27
  %61 = vmatprep.subr.mxu0 0.0
  %62 = vmatpush1.msra.mxu0 0.0
  %63 = vmatprep.subr.mxu0 0.0
  %64 = vmatpush1.msra.mxu0 0.0
  %65 = vmatprep.subr.mxu0 0.0
  %66 = vmatpush1.msra.mxu0 0.0
  %67 = vmatprep.subr.mxu0 0.0
  %68 = vmatpush1.msra.mxu0 0.0
  %69 = vmatprep.subr.mxu0 0.0
  %70 = vmatpush1.msra.mxu0 0.0
  %71 = vmatprep.subr.mxu0 0.0
  %72 = vmatpush1.msra.mxu0 0.0
  %73 = vmatprep.subr.mxu0 0.0
  %74 = vmatpush1.msra.mxu0 0.0
  %75 = vmatprep.subr.mxu0 0.0
  %76 = vmatpush1.msra.mxu0 0.0
  %77 = vmatprep.subr.mxu0 0.0
  %78 = vmatpush1.msra.mxu0 0.0
  %79 = vmatprep.subr.mxu0 0.0
  %80 = vmatpush1.msra.mxu0 0.0
  %81 = vmatprep.subr.mxu0 0.0
  %82 = vmatpush1.msra.mxu0 0.0
  %83 = vmatprep.subr.mxu0 0.0
  %84 = vmatpush1.msra.mxu0 0.0
  %85 = vmatprep.subr.mxu0 0.0
  %86 = vmatpush1.msra.mxu0 0.0
  %87 = vmatprep.subr.mxu0 0.0
  %88 = vmatpush1.msra.mxu0 0.0
  %89 = vmatprep.subr.mxu0 0.0
  %90 = vmatpush1.msra.mxu0 0.0
  %91 = vmatprep.subr.mxu0 0.0
  %92 = vmatpush1.msra.mxu0 0.0
  %93 = vmatprep.subr.mxu0 0.0
  %94 = vmatpush1.msra.mxu0 0.0
  %95 = vmatprep.subr.mxu0 0.0
  %96 = vmatpush1.msra.mxu0 0.0
  %97 = vmatprep.subr.mxu0 0.0
  %98 = vmatpush1.msra.mxu0 0.0
  %99 = vmatprep.subr.mxu0 0.0
  %100 = vmatpush1.msra.mxu0 0.0
  %101 = vmatprep.subr.mxu0 0.0
  %102 = vmatpush1.msra.mxu0 0.0
  %103 = vmatprep.subr.mxu0 0.0
  %104 = vmatpush1.msra.mxu0 0.0
  %105 = vmatprep.subr.mxu0 0.0
  %106 = vmatpush1.msra.mxu0 0.0
  %107 = vmatprep.subr.mxu0 0.0
  %108 = vmatpush1.msra.mxu0 0.0
  %109 = vmatprep.subr.mxu0 0.0
  %110 = vmatpush1.msra.mxu0 0.0
  %111 = vmatprep.subr.mxu0 0.0
  %112 = vmatpush1.msra.mxu0 0.0
  %113 = vmatprep.subr.mxu0 0.0
  %114 = vmatpush1.msra.mxu0 0.0
  %115 = vmatprep.subr.mxu0 0.0
  %116 = vmatpush1.msra.mxu0 0.0
  %117 = vmatprep.mubr.f32.mxu0 0.0
  %118 = vmatmul.mubr.f32.gmra.mrb[0].mxu0 %v30
  %v119 = vpop.f32.mrb[0].mxu0
  %v120 = vadd.f32 0.0, %v119
  %v121 = vpop.f32.mrb[0].mxu0
  %122 = vmatprep.mubr.f32.mxu0 0.0
  %123 = vmatmul.mubr.f32.gmra.mrb[0].mxu0 %v33
  %v124 = vpop.f32.mrb[0].mxu0
  %v125 = vadd.f32 0.0, %v124
  %v126 = vpop.f32.mrb[0].mxu0
  %127 = vmatprep.mubr.f32.mxu0 0.0
  %128 = vmatmul.mubr.f32.gmra.mrb[0].mxu0 %v36
  %v129 = vpop.f32.mrb[0].mxu0
  %v130 = vadd.f32 0.0, %v129
  %v131 = vpop.f32.mrb[0].mxu0
  %132 = vmatprep.mubr.f32.mxu0 0.0
  %133 = vmatmul.mubr.f32.gmra.mrb[0].mxu0 %v39
  %v134 = vpop.f32.mrb[0].mxu0
  %v135 = vadd.f32 0.0, %v134
  %v136 = vpop.f32.mrb[0].mxu0
  %137 = vmatprep.mubr.f32.mxu0 0.0
  %138 = vmatmul.mubr.f32.gmra.mrb[0].mxu0 %v42
  %v139 = vpop.f32.mrb[0].mxu0
  %v140 = vadd.f32 0.0, %v139
  %v141 = vpop.f32.mrb[0].mxu0
  %142 = vmatprep.mubr.f32.mxu0 0.0
  %143 = vmatmul.mubr.f32.gmra.mrb[0].mxu0 %v45
  %v144 = vpop.f32.mrb[0].mxu0
  %v145 = vadd.f32 0.0, %v144
  %v146 = vpop.f32.mrb[0].mxu0
  %147 = vmatprep.mubr.f32.mxu0 0.0
  %148 = vmatmul.mubr.f32.gmra.mrb[0].mxu0 %v48
  %v149 = vpop.f32.mrb[0].mxu0
  %v150 = vadd.f32 0.0, %v149
  %v151 = vpop.f32.mrb[0].mxu0
  %152 = vmatprep.mubr.f32.mxu0 0.0
  %153 = vmatmul.mubr.f32.gmra.mrb[0].mxu0 %v51
  %v154 = vpop.f32.mrb[0].mxu0
  %v155 = vadd.f32 0.0, %v154
  %v156 = vpop.f32.mrb[0].mxu0
  %157 = vdwg.mxu0
  %v158 = vtanh.pop %v120
  %v159 = vtanh.pop %v125
  %v160 = vtanh.pop %v130
  %v161 = vtanh.pop %v135
  %v162 = vtanh.pop %v140
  %v163 = vtanh.pop %v145
  %v164 = vtanh.pop %v150
  %v165 = vtanh.pop %v155
  %v166 = vxor.u32 %v120, 2147483648
  %v167 = vxor.u32 %v125, 2147483648
  %v168 = vxor.u32 %v130, 2147483648
  %v169 = vxor.u32 %v135, 2147483648
  %v170 = vxor.u32 %v140, 2147483648
  %v171 = vxor.u32 %v145, 2147483648
  %v172 = vxor.u32 %v150, 2147483648
  %v173 = vxor.u32 %v155, 2147483648
  %v174 = vmul.f32 %v166, 1.442695
  %v175 = vpow.pop %v174
  %v176 = vmul.f32 %v167, 1.442695
  %v177 = vpow.pop %v176
  %v178 = vmul.f32 %v168, 1.442695
  %v179 = vpow.pop %v178
  %v180 = vmul.f32 %v169, 1.442695
  %v181 = vpow.pop %v180
  %v182 = vmul.f32 %v170, 1.442695
  %v183 = vpow.pop %v182
  %v184 = vmul.f32 %v171, 1.442695
  %v185 = vpow.pop %v184
  %v186 = vmul.f32 %v172, 1.442695
  %v187 = vpow.pop %v186
  %v188 = vmul.f32 %v173, 1.442695
  %v189 = vpow.pop %v188
  %v190 = vadd.f32 %v175, 1.0
  %v191 = vadd.f32 %v177, 1.0
  %v192 = vadd.f32 %v179, 1.0
  %v193 = vadd.f32 %v181, 1.0
  %v194 = vadd.f32 %v183, 1.0
  %v195 = vadd.f32 %v185, 1.0
  %v196 = vadd.f32 %v187, 1.0
  %v197 = vadd.f32 %v189, 1.0
  %v198 = vrcp.pop %v190
  %v199 = vmul.f32 1.0, %v198
  %v200 = vrcp.pop %v191
  %v201 = vmul.f32 1.0, %v200
  %v202 = vrcp.pop %v192
  %v203 = vmul.f32 1.0, %v202
  %v204 = vrcp.pop %v193
  %v205 = vmul.f32 1.0, %v204
  %v206 = vrcp.pop %v194
  %v207 = vmul.f32 1.0, %v206
  %v208 = vrcp.pop %v195
  %v209 = vmul.f32 1.0, %v208
  %v210 = vrcp.pop %v196
  %v211 = vmul.f32 1.0, %v210
  %v212 = vrcp.pop %v197
  %v213 = vmul.f32 1.0, %v212
  %222 = vrot.lane.b32.xlu0 %v199, 112
  %v223 = vpop.permute.xlu0 %222
  %224 = vrot.lane.b32.xlu0 %v201, 112
  %v225 = vpop.permute.xlu0 %224
  %226 = vrot.lane.b32.xlu0 %v203, 112
  %v227 = vpop.permute.xlu0 %226
  %228 = vrot.lane.b32.xlu0 %v205, 112
  %v229 = vpop.permute.xlu0 %228
  %230 = vrot.lane.b32.xlu0 %v207, 112
  %v231 = vpop.permute.xlu0 %230
  %232 = vrot.lane.b32.xlu0 %v209, 112
  %v233 = vpop.permute.xlu0 %232
  %234 = vrot.lane.b32.xlu0 %v211, 112
  %v235 = vpop.permute.xlu0 %234
  %236 = vrot.lane.b32.xlu0 %v213, 112
  %v237 = vpop.permute.xlu0 %236
  %v246 = vmul.f32 %v158, %v223
  %v247 = vmul.f32 %v159, %v225
  %v248 = vmul.f32 %v160, %v227
  %v249 = vmul.f32 %v161, %v229
  %v250 = vmul.f32 %v162, %v231
  %v251 = vmul.f32 %v163, %v233
  %v252 = vmul.f32 %v164, %v235
  %v253 = vmul.f32 %v165, %v237
  %v254 = vld [vmem:[%s2] sm:$0x1]
  %v256 = vlaneseq
  %v257 = vshrl.u32 %v256, 7
  %v258 = vsub.s32 0, %v257
  %v259 = vrot.slane %v254, %v258
  %v261 = vmul.f32 %v246, %v259
  %v262 = vmul.f32 %v247, %v259
  %v263 = vmul.f32 %v248, %v259
  %v264 = vmul.f32 %v249, %v259
  %v265 = vmul.f32 %v250, %v259
  %v266 = vmul.f32 %v251, %v259
  %v267 = vmul.f32 %v252, %v259
  %v268 = vmul.f32 %v253, %v259
  %vm269 = vcmask 130048
  %v270 = vsel %vm269, %v261, 0.0
  %271 = vadd.xlane.f32.xlu0 %v270
  %v272 = vpop.xlane.xlu0 %271
  %v273 = vsel %vm269, %v262, 0.0
  %274 = vadd.xlane.f32.xlu0 %v273
  %v275 = vpop.xlane.xlu0 %274
  %v276 = vsel %vm269, %v263, 0.0
  %277 = vadd.xlane.f32.xlu0 %v276
  %v278 = vpop.xlane.xlu0 %277
  %v279 = vsel %vm269, %v264, 0.0
  %280 = vadd.xlane.f32.xlu0 %v279
  %v281 = vpop.xlane.xlu0 %280
  %v282 = vsel %vm269, %v265, 0.0
  %283 = vadd.xlane.f32.xlu0 %v282
  %v284 = vpop.xlane.xlu0 %283
  %v285 = vsel %vm269, %v266, 0.0
  %286 = vadd.xlane.f32.xlu0 %v285
  %v287 = vpop.xlane.xlu0 %286
  %v288 = vsel %vm269, %v267, 0.0
  %289 = vadd.xlane.f32.xlu0 %v288
  %v290 = vpop.xlane.xlu0 %289
  %v291 = vsel %vm269, %v268, 0.0
  %292 = vadd.xlane.f32.xlu0 %v291
  %v293 = vpop.xlane.xlu0 %292
  %v302 = vlaneseq
  %v303 = vand.u32 %v302, 127
  %v304 = vlaneseq
  %v305 = vshrl.u32 %v304, 7
  %v306 = vsub.s32 %v303, %v305
  %v307 = vrot.slane %v272, %v306
  %v308 = vlaneseq
  %v309 = vshrl.u32 %v308, 7
  %v310 = vsub.s32 %v303, %v309
  %v311 = vrot.slane %v275, %v310
  %v312 = vlaneseq
  %v313 = vshrl.u32 %v312, 7
  %v314 = vsub.s32 %v303, %v313
  %v315 = vrot.slane %v278, %v314
  %v316 = vlaneseq
  %v317 = vshrl.u32 %v316, 7
  %v318 = vsub.s32 %v303, %v317
  %v319 = vrot.slane %v281, %v318
  %v320 = vlaneseq
  %v321 = vshrl.u32 %v320, 7
  %v322 = vsub.s32 %v303, %v321
  %v323 = vrot.slane %v284, %v322
  %v324 = vlaneseq
  %v325 = vshrl.u32 %v324, 7
  %v326 = vsub.s32 %v303, %v325
  %v327 = vrot.slane %v287, %v326
  %v328 = vlaneseq
  %v329 = vshrl.u32 %v328, 7
  %v330 = vsub.s32 %v303, %v329
  %v331 = vrot.slane %v290, %v330
  %v332 = vlaneseq
  %v333 = vshrl.u32 %v332, 7
  %v334 = vsub.s32 %v303, %v333
  %v335 = vrot.slane %v293, %v334
  %vm336 = vcmask 1041409
  %v337 = vsel %vm336, %v311, %v307
  %vm338 = vcmask 1042434
  %v339 = vsel %vm338, %v315, %v337
  %vm340 = vcmask 1043459
  %v341 = vsel %vm340, %v319, %v339
  %vm342 = vcmask 1044484
  %v343 = vsel %vm342, %v323, %v341
  %vm344 = vcmask 1045509
  %v345 = vsel %vm344, %v327, %v343
  %vm346 = vcmask 1046534
  %v347 = vsel %vm346, %v331, %v345
  %vm348 = vcmask 1047559
  %v349 = vsel %vm348, %v335, %v347
  %vm351 = vcmask 64512
  %v352 = vsel %vm351, %v349, -inf
  %353 = vmax.xlane.f32.xlu0 %v352
  %v354 = vpop.xlane.xlu0 %353
  %v356 = vlaneseq
  %v357 = vshrl.u32 %v356, 7
  %v358 = vsub.s32 0, %v357
  %v359 = vrot.slane %v354, %v358
  %v360 = vlaneseq
  %v361 = vshrl.u32 %v360, 7
  %v362 = vsub.s32 1, %v361
  %v363 = vrot.slane %v354, %v362
  %v364 = vlaneseq
  %v365 = vshrl.u32 %v364, 7
  %v366 = vsub.s32 2, %v365
  %v367 = vrot.slane %v354, %v366
  %v368 = vlaneseq
  %v369 = vshrl.u32 %v368, 7
  %v370 = vsub.s32 3, %v369
  %v371 = vrot.slane %v354, %v370
  %v372 = vlaneseq
  %v373 = vshrl.u32 %v372, 7
  %v374 = vsub.s32 4, %v373
  %v375 = vrot.slane %v354, %v374
  %v376 = vlaneseq
  %v377 = vshrl.u32 %v376, 7
  %v378 = vsub.s32 5, %v377
  %v379 = vrot.slane %v354, %v378
  %v380 = vlaneseq
  %v381 = vshrl.u32 %v380, 7
  %v382 = vsub.s32 6, %v381
  %v383 = vrot.slane %v354, %v382
  %v384 = vlaneseq
  %v385 = vshrl.u32 %v384, 7
  %v386 = vsub.s32 7, %v385
  %v387 = vrot.slane %v354, %v386
  %v396 = vsub.f32 %v272, %v359
  %v397 = vsub.f32 %v275, %v363
  %v398 = vsub.f32 %v278, %v367
  %v399 = vsub.f32 %v281, %v371
  %v400 = vsub.f32 %v284, %v375
  %v401 = vsub.f32 %v287, %v379
  %v402 = vsub.f32 %v290, %v383
  %v403 = vsub.f32 %v293, %v387
  %v404 = vmul.f32 %v396, 1.442695
  %v405 = vpow.pop %v404
  %v406 = vmul.f32 %v397, 1.442695
  %v407 = vpow.pop %v406
  %v408 = vmul.f32 %v398, 1.442695
  %v409 = vpow.pop %v408
  %v410 = vmul.f32 %v399, 1.442695
  %v411 = vpow.pop %v410
  %v412 = vmul.f32 %v400, 1.442695
  %v413 = vpow.pop %v412
  %v414 = vmul.f32 %v401, 1.442695
  %v415 = vpow.pop %v414
  %v416 = vmul.f32 %v402, 1.442695
  %v417 = vpow.pop %v416
  %v418 = vmul.f32 %v403, 1.442695
  %v419 = vpow.pop %v418
  %428 = vset.pattern.permute.xlu0 0
  %429 = vperm.xlu0 %428, %v405
  %v430 = vpop.permute.xlu0 %429
  %431 = vset.pattern.permute.xlu0 0
  %432 = vperm.xlu0 %431, %v407
  %v433 = vpop.permute.xlu0 %432
  %434 = vset.pattern.permute.xlu0 0
  %435 = vperm.xlu0 %434, %v409
  %v436 = vpop.permute.xlu0 %435
  %437 = vset.pattern.permute.xlu0 0
  %438 = vperm.xlu0 %437, %v411
  %v439 = vpop.permute.xlu0 %438
  %440 = vset.pattern.permute.xlu0 0
  %441 = vperm.xlu0 %440, %v413
  %v442 = vpop.permute.xlu0 %441
  %443 = vset.pattern.permute.xlu0 0
  %444 = vperm.xlu0 %443, %v415
  %v445 = vpop.permute.xlu0 %444
  %446 = vset.pattern.permute.xlu0 0
  %447 = vperm.xlu0 %446, %v417
  %v448 = vpop.permute.xlu0 %447
  %449 = vset.pattern.permute.xlu0 0
  %450 = vperm.xlu0 %449, %v419
  %v451 = vpop.permute.xlu0 %450
  %v452 = vlaneseq
  %v453 = vshrl.u32 %v452, 7
  %v454 = vsub.s32 %v303, %v453
  %v455 = vrot.slane %v430, %v454
  %v456 = vlaneseq
  %v457 = vshrl.u32 %v456, 7
  %v458 = vsub.s32 %v303, %v457
  %v459 = vrot.slane %v433, %v458
  %v460 = vlaneseq
  %v461 = vshrl.u32 %v460, 7
  %v462 = vsub.s32 %v303, %v461
  %v463 = vrot.slane %v436, %v462
  %v464 = vlaneseq
  %v465 = vshrl.u32 %v464, 7
  %v466 = vsub.s32 %v303, %v465
  %v467 = vrot.slane %v439, %v466
  %v468 = vlaneseq
  %v469 = vshrl.u32 %v468, 7
  %v470 = vsub.s32 %v303, %v469
  %v471 = vrot.slane %v442, %v470
  %v472 = vlaneseq
  %v473 = vshrl.u32 %v472, 7
  %v474 = vsub.s32 %v303, %v473
  %v475 = vrot.slane %v445, %v474
  %v476 = vlaneseq
  %v477 = vshrl.u32 %v476, 7
  %v478 = vsub.s32 %v303, %v477
  %v479 = vrot.slane %v448, %v478
  %v480 = vlaneseq
  %v481 = vshrl.u32 %v480, 7
  %v482 = vsub.s32 %v303, %v481
  %v483 = vrot.slane %v451, %v482
  %v484 = vsel %vm336, %v459, %v455
  %v485 = vsel %vm338, %v463, %v484
  %v486 = vsel %vm340, %v467, %v485
  %v487 = vsel %vm342, %v471, %v486
  %v488 = vsel %vm344, %v475, %v487
  %v489 = vsel %vm346, %v479, %v488
  %v490 = vsel %vm348, %v483, %v489
  %v492 = vsel %vm351, %v490, 0.0
  %493 = vadd.xlane.f32.xlu0 %v492
  %v494 = vpop.xlane.xlu0 %493
  %v495 = vrcp.pop %v494
  %v497 = vlaneseq
  %v498 = vshrl.u32 %v497, 7
  %v499 = vsub.s32 0, %v498
  %v500 = vrot.slane %v495, %v499
  %v501 = vlaneseq
  %v502 = vshrl.u32 %v501, 7
  %v503 = vsub.s32 1, %v502
  %v504 = vrot.slane %v495, %v503
  %v505 = vlaneseq
  %v506 = vshrl.u32 %v505, 7
  %v507 = vsub.s32 2, %v506
  %v508 = vrot.slane %v495, %v507
  %v509 = vlaneseq
  %v510 = vshrl.u32 %v509, 7
  %v511 = vsub.s32 3, %v510
  %v512 = vrot.slane %v495, %v511
  %v513 = vlaneseq
  %v514 = vshrl.u32 %v513, 7
  %v515 = vsub.s32 4, %v514
  %v516 = vrot.slane %v495, %v515
  %v517 = vlaneseq
  %v518 = vshrl.u32 %v517, 7
  %v519 = vsub.s32 5, %v518
  %v520 = vrot.slane %v495, %v519
  %v521 = vlaneseq
  %v522 = vshrl.u32 %v521, 7
  %v523 = vsub.s32 6, %v522
  %v524 = vrot.slane %v495, %v523
  %v525 = vlaneseq
  %v526 = vshrl.u32 %v525, 7
  %v527 = vsub.s32 7, %v526
  %v528 = vrot.slane %v495, %v527
  %v537 = vmul.f32 %v405, %v500
  %v538 = vmul.f32 %v407, %v504
  %v539 = vmul.f32 %v409, %v508
  %v540 = vmul.f32 %v411, %v512
  %v541 = vmul.f32 %v413, %v516
  %v542 = vmul.f32 %v415, %v520
  %v543 = vmul.f32 %v417, %v524
  %v544 = vmul.f32 %v419, %v528
  %553 = vset.pattern.permute.xlu0 0
  %554 = vperm.xlu0 %553, %v537
  %v555 = vpop.permute.xlu0 %554
  %556 = vset.pattern.permute.xlu0 0
  %557 = vperm.xlu0 %556, %v538
  %v558 = vpop.permute.xlu0 %557
  %559 = vset.pattern.permute.xlu0 0
  %560 = vperm.xlu0 %559, %v539
  %v561 = vpop.permute.xlu0 %560
  %562 = vset.pattern.permute.xlu0 0
  %563 = vperm.xlu0 %562, %v540
  %v564 = vpop.permute.xlu0 %563
  %565 = vset.pattern.permute.xlu0 0
  %566 = vperm.xlu0 %565, %v541
  %v567 = vpop.permute.xlu0 %566
  %568 = vset.pattern.permute.xlu0 0
  %569 = vperm.xlu0 %568, %v542
  %v570 = vpop.permute.xlu0 %569
  %571 = vset.pattern.permute.xlu0 0
  %572 = vperm.xlu0 %571, %v543
  %v573 = vpop.permute.xlu0 %572
  %574 = vset.pattern.permute.xlu0 0
  %575 = vperm.xlu0 %574, %v544
  %v576 = vpop.permute.xlu0 %575
  %v577 = vlaneseq
  %v578 = vshrl.u32 %v577, 7
  %v579 = vsub.s32 %v303, %v578
  %v580 = vrot.slane %v555, %v579
  %v581 = vlaneseq
  %v582 = vshrl.u32 %v581, 7
  %v583 = vsub.s32 %v303, %v582
  %v584 = vrot.slane %v558, %v583
  %v585 = vlaneseq
  %v586 = vshrl.u32 %v585, 7
  %v587 = vsub.s32 %v303, %v586
  %v588 = vrot.slane %v561, %v587
  %v589 = vlaneseq
  %v590 = vshrl.u32 %v589, 7
  %v591 = vsub.s32 %v303, %v590
  %v592 = vrot.slane %v564, %v591
  %v593 = vlaneseq
  %v594 = vshrl.u32 %v593, 7
  %v595 = vsub.s32 %v303, %v594
  %v596 = vrot.slane %v567, %v595
  %v597 = vlaneseq
  %v598 = vshrl.u32 %v597, 7
  %v599 = vsub.s32 %v303, %v598
  %v600 = vrot.slane %v570, %v599
  %v601 = vlaneseq
  %v602 = vshrl.u32 %v601, 7
  %v603 = vsub.s32 %v303, %v602
  %v604 = vrot.slane %v573, %v603
  %v605 = vlaneseq
  %v606 = vshrl.u32 %v605, 7
  %v607 = vsub.s32 %v303, %v606
  %v608 = vrot.slane %v576, %v607
  %v609 = vsel %vm336, %v584, %v580
  %v610 = vsel %vm338, %v588, %v609
  %v611 = vsel %vm340, %v592, %v610
  %v612 = vsel %vm342, %v596, %v611
  %v613 = vsel %vm344, %v600, %v612
  %v614 = vsel %vm346, %v604, %v613
  %v615 = vsel %vm348, %v608, %v614
  %617 = vst.msk [vmem:[%s4] sm:$0xff] %vm351, %v615
  %v618 = vsel %vm351, %v580, 0
  %620 = vmatprep.subr.mxu0 0.0
  %621 = vmatpush1.msra.mxu0 %v16
  %622 = vmatprep.subr.mxu0 0.0
  %623 = vmatpush1.msra.mxu0 0.0
  %624 = vmatprep.subr.mxu0 0.0
  %625 = vmatpush1.msra.mxu0 0.0
  %626 = vmatprep.subr.mxu0 0.0
  %627 = vmatpush1.msra.mxu0 0.0
  %628 = vmatprep.subr.mxu0 0.0
  %629 = vmatpush1.msra.mxu0 0.0
  %630 = vmatprep.subr.mxu0 0.0
  %631 = vmatpush1.msra.mxu0 0.0
  %632 = vmatprep.subr.mxu0 0.0
  %633 = vmatpush1.msra.mxu0 0.0
  %634 = vmatprep.subr.mxu0 0.0
  %635 = vmatpush1.msra.mxu0 0.0
  %636 = vmatprep.subr.mxu0 0.0
  %637 = vmatpush1.msra.mxu0 0.0
  %638 = vmatprep.subr.mxu0 0.0
  %639 = vmatpush1.msra.mxu0 0.0
  %640 = vmatprep.subr.mxu0 0.0
  %641 = vmatpush1.msra.mxu0 0.0
  %642 = vmatprep.subr.mxu0 0.0
  %643 = vmatpush1.msra.mxu0 0.0
  %644 = vmatprep.subr.mxu0 0.0
  %645 = vmatpush1.msra.mxu0 0.0
  %646 = vmatprep.subr.mxu0 0.0
  %647 = vmatpush1.msra.mxu0 0.0
  %648 = vmatprep.subr.mxu0 0.0
  %649 = vmatpush1.msra.mxu0 0.0
  %650 = vmatprep.subr.mxu0 0.0
  %651 = vmatpush1.msra.mxu0 0.0
  %652 = vmatprep.subr.mxu0 0.0
  %653 = vmatpush1.msra.mxu0 0.0
  %654 = vmatprep.subr.mxu0 0.0
  %655 = vmatpush1.msra.mxu0 0.0
  %656 = vmatprep.subr.mxu0 0.0
  %657 = vmatpush1.msra.mxu0 0.0
  %658 = vmatprep.subr.mxu0 0.0
  %659 = vmatpush1.msra.mxu0 0.0
  %660 = vmatprep.subr.mxu0 0.0
  %661 = vmatpush1.msra.mxu0 0.0
  %662 = vmatprep.subr.mxu0 0.0
  %663 = vmatpush1.msra.mxu0 0.0
  %664 = vmatprep.subr.mxu0 0.0
  %665 = vmatpush1.msra.mxu0 0.0
  %666 = vmatprep.subr.mxu0 0.0
  %667 = vmatpush1.msra.mxu0 0.0
  %668 = vmatprep.subr.mxu0 0.0
  %669 = vmatpush1.msra.mxu0 0.0
  %670 = vmatprep.subr.mxu0 0.0
  %671 = vmatpush1.msra.mxu0 0.0
  %672 = vmatprep.subr.mxu0 0.0
  %673 = vmatpush1.msra.mxu0 0.0
  %674 = vmatprep.subr.mxu0 0.0
  %675 = vmatpush1.msra.mxu0 0.0
  %676 = vmatprep.subr.mxu0 0.0
  %677 = vmatpush1.msra.mxu0 0.0
  %678 = vmatprep.subr.mxu0 0.0
  %679 = vmatpush1.msra.mxu0 0.0
  %680 = vmatprep.subr.mxu0 0.0
  %681 = vmatpush1.msra.mxu0 0.0
  %682 = vmatprep.subr.mxu0 0.0
  %683 = vmatpush1.msra.mxu0 0.0
  %684 = vmatprep.mubr.f32.mxu0 0.0
  %685 = vmatmul.mubr.f32.gmra.mrb[0].mxu0 %v618
  %v686 = vpop.f32.mrb[0].mxu0
  %v687 = vadd.f32 0.0, %v686
  %v688 = vpop.f32.mrb[0].mxu0
  %689 = vdwg.mxu0
  %v690 = vsel %vm351, %v584, 0
  %692 = vmatprep.subr.mxu0 0.0
  %693 = vmatpush1.msra.mxu0 %v17
  %694 = vmatprep.subr.mxu0 0.0
  %695 = vmatpush1.msra.mxu0 0.0
  %696 = vmatprep.subr.mxu0 0.0
  %697 = vmatpush1.msra.mxu0 0.0
  %698 = vmatprep.subr.mxu0 0.0
  %699 = vmatpush1.msra.mxu0 0.0
  %700 = vmatprep.subr.mxu0 0.0
  %701 = vmatpush1.msra.mxu0 0.0
  %702 = vmatprep.subr.mxu0 0.0
  %703 = vmatpush1.msra.mxu0 0.0
  %704 = vmatprep.subr.mxu0 0.0
  %705 = vmatpush1.msra.mxu0 0.0
  %706 = vmatprep.subr.mxu0 0.0
  %707 = vmatpush1.msra.mxu0 0.0
  %708 = vmatprep.subr.mxu0 0.0
  %709 = vmatpush1.msra.mxu0 0.0
  %710 = vmatprep.subr.mxu0 0.0
  %711 = vmatpush1.msra.mxu0 0.0
  %712 = vmatprep.subr.mxu0 0.0
  %713 = vmatpush1.msra.mxu0 0.0
  %714 = vmatprep.subr.mxu0 0.0
  %715 = vmatpush1.msra.mxu0 0.0
  %716 = vmatprep.subr.mxu0 0.0
  %717 = vmatpush1.msra.mxu0 0.0
  %718 = vmatprep.subr.mxu0 0.0
  %719 = vmatpush1.msra.mxu0 0.0
  %720 = vmatprep.subr.mxu0 0.0
  %721 = vmatpush1.msra.mxu0 0.0
  %722 = vmatprep.subr.mxu0 0.0
  %723 = vmatpush1.msra.mxu0 0.0
  %724 = vmatprep.subr.mxu0 0.0
  %725 = vmatpush1.msra.mxu0 0.0
  %726 = vmatprep.subr.mxu0 0.0
  %727 = vmatpush1.msra.mxu0 0.0
  %728 = vmatprep.subr.mxu0 0.0
  %729 = vmatpush1.msra.mxu0 0.0
  %730 = vmatprep.subr.mxu0 0.0
  %731 = vmatpush1.msra.mxu0 0.0
  %732 = vmatprep.subr.mxu0 0.0
  %733 = vmatpush1.msra.mxu0 0.0
  %734 = vmatprep.subr.mxu0 0.0
  %735 = vmatpush1.msra.mxu0 0.0
  %736 = vmatprep.subr.mxu0 0.0
  %737 = vmatpush1.msra.mxu0 0.0
  %738 = vmatprep.subr.mxu0 0.0
  %739 = vmatpush1.msra.mxu0 0.0
  %740 = vmatprep.subr.mxu0 0.0
  %741 = vmatpush1.msra.mxu0 0.0
  %742 = vmatprep.subr.mxu0 0.0
  %743 = vmatpush1.msra.mxu0 0.0
  %744 = vmatprep.subr.mxu0 0.0
  %745 = vmatpush1.msra.mxu0 0.0
  %746 = vmatprep.subr.mxu0 0.0
  %747 = vmatpush1.msra.mxu0 0.0
  %748 = vmatprep.subr.mxu0 0.0
  %749 = vmatpush1.msra.mxu0 0.0
  %750 = vmatprep.subr.mxu0 0.0
  %751 = vmatpush1.msra.mxu0 0.0
  %752 = vmatprep.subr.mxu0 0.0
  %753 = vmatpush1.msra.mxu0 0.0
  %754 = vmatprep.subr.mxu0 0.0
  %755 = vmatpush1.msra.mxu0 0.0
  %756 = vmatprep.mubr.f32.mxu0 0.0
  %757 = vmatmul.mubr.f32.gmra.mrb[0].mxu0 %v690
  %v758 = vpop.f32.mrb[0].mxu0
  %v759 = vadd.f32 0.0, %v758
  %v760 = vpop.f32.mrb[0].mxu0
  %761 = vdwg.mxu0
  %v762 = vsel %vm351, %v588, 0
  %764 = vmatprep.subr.mxu0 0.0
  %765 = vmatpush1.msra.mxu0 %v18
  %766 = vmatprep.subr.mxu0 0.0
  %767 = vmatpush1.msra.mxu0 0.0
  %768 = vmatprep.subr.mxu0 0.0
  %769 = vmatpush1.msra.mxu0 0.0
  %770 = vmatprep.subr.mxu0 0.0
  %771 = vmatpush1.msra.mxu0 0.0
  %772 = vmatprep.subr.mxu0 0.0
  %773 = vmatpush1.msra.mxu0 0.0
  %774 = vmatprep.subr.mxu0 0.0
  %775 = vmatpush1.msra.mxu0 0.0
  %776 = vmatprep.subr.mxu0 0.0
  %777 = vmatpush1.msra.mxu0 0.0
  %778 = vmatprep.subr.mxu0 0.0
  %779 = vmatpush1.msra.mxu0 0.0
  %780 = vmatprep.subr.mxu0 0.0
  %781 = vmatpush1.msra.mxu0 0.0
  %782 = vmatprep.subr.mxu0 0.0
  %783 = vmatpush1.msra.mxu0 0.0
  %784 = vmatprep.subr.mxu0 0.0
  %785 = vmatpush1.msra.mxu0 0.0
  %786 = vmatprep.subr.mxu0 0.0
  %787 = vmatpush1.msra.mxu0 0.0
  %788 = vmatprep.subr.mxu0 0.0
  %789 = vmatpush1.msra.mxu0 0.0
  %790 = vmatprep.subr.mxu0 0.0
  %791 = vmatpush1.msra.mxu0 0.0
  %792 = vmatprep.subr.mxu0 0.0
  %793 = vmatpush1.msra.mxu0 0.0
  %794 = vmatprep.subr.mxu0 0.0
  %795 = vmatpush1.msra.mxu0 0.0
  %796 = vmatprep.subr.mxu0 0.0
  %797 = vmatpush1.msra.mxu0 0.0
  %798 = vmatprep.subr.mxu0 0.0
  %799 = vmatpush1.msra.mxu0 0.0
  %800 = vmatprep.subr.mxu0 0.0
  %801 = vmatpush1.msra.mxu0 0.0
  %802 = vmatprep.subr.mxu0 0.0
  %803 = vmatpush1.msra.mxu0 0.0
  %804 = vmatprep.subr.mxu0 0.0
  %805 = vmatpush1.msra.mxu0 0.0
  %806 = vmatprep.subr.mxu0 0.0
  %807 = vmatpush1.msra.mxu0 0.0
  %808 = vmatprep.subr.mxu0 0.0
  %809 = vmatpush1.msra.mxu0 0.0
  %810 = vmatprep.subr.mxu0 0.0
  %811 = vmatpush1.msra.mxu0 0.0
  %812 = vmatprep.subr.mxu0 0.0
  %813 = vmatpush1.msra.mxu0 0.0
  %814 = vmatprep.subr.mxu0 0.0
  %815 = vmatpush1.msra.mxu0 0.0
  %816 = vmatprep.subr.mxu0 0.0
  %817 = vmatpush1.msra.mxu0 0.0
  %818 = vmatprep.subr.mxu0 0.0
  %819 = vmatpush1.msra.mxu0 0.0
  %820 = vmatprep.subr.mxu0 0.0
  %821 = vmatpush1.msra.mxu0 0.0
  %822 = vmatprep.subr.mxu0 0.0
  %823 = vmatpush1.msra.mxu0 0.0
  %824 = vmatprep.subr.mxu0 0.0
  %825 = vmatpush1.msra.mxu0 0.0
  %826 = vmatprep.subr.mxu0 0.0
  %827 = vmatpush1.msra.mxu0 0.0
  %828 = vmatprep.mubr.f32.mxu0 0.0
  %829 = vmatmul.mubr.f32.gmra.mrb[0].mxu0 %v762
  %v830 = vpop.f32.mrb[0].mxu0
  %v831 = vadd.f32 0.0, %v830
  %v832 = vpop.f32.mrb[0].mxu0
  %833 = vdwg.mxu0
  %v834 = vsel %vm351, %v592, 0
  %836 = vmatprep.subr.mxu0 0.0
  %837 = vmatpush1.msra.mxu0 %v19
  %838 = vmatprep.subr.mxu0 0.0
  %839 = vmatpush1.msra.mxu0 0.0
  %840 = vmatprep.subr.mxu0 0.0
  %841 = vmatpush1.msra.mxu0 0.0
  %842 = vmatprep.subr.mxu0 0.0
  %843 = vmatpush1.msra.mxu0 0.0
  %844 = vmatprep.subr.mxu0 0.0
  %845 = vmatpush1.msra.mxu0 0.0
  %846 = vmatprep.subr.mxu0 0.0
  %847 = vmatpush1.msra.mxu0 0.0
  %848 = vmatprep.subr.mxu0 0.0
  %849 = vmatpush1.msra.mxu0 0.0
  %850 = vmatprep.subr.mxu0 0.0
  %851 = vmatpush1.msra.mxu0 0.0
  %852 = vmatprep.subr.mxu0 0.0
  %853 = vmatpush1.msra.mxu0 0.0
  %854 = vmatprep.subr.mxu0 0.0
  %855 = vmatpush1.msra.mxu0 0.0
  %856 = vmatprep.subr.mxu0 0.0
  %857 = vmatpush1.msra.mxu0 0.0
  %858 = vmatprep.subr.mxu0 0.0
  %859 = vmatpush1.msra.mxu0 0.0
  %860 = vmatprep.subr.mxu0 0.0
  %861 = vmatpush1.msra.mxu0 0.0
  %862 = vmatprep.subr.mxu0 0.0
  %863 = vmatpush1.msra.mxu0 0.0
  %864 = vmatprep.subr.mxu0 0.0
  %865 = vmatpush1.msra.mxu0 0.0
  %866 = vmatprep.subr.mxu0 0.0
  %867 = vmatpush1.msra.mxu0 0.0
  %868 = vmatprep.subr.mxu0 0.0
  %869 = vmatpush1.msra.mxu0 0.0
  %870 = vmatprep.subr.mxu0 0.0
  %871 = vmatpush1.msra.mxu0 0.0
  %872 = vmatprep.subr.mxu0 0.0
  %873 = vmatpush1.msra.mxu0 0.0
  %874 = vmatprep.subr.mxu0 0.0
  %875 = vmatpush1.msra.mxu0 0.0
  %876 = vmatprep.subr.mxu0 0.0
  %877 = vmatpush1.msra.mxu0 0.0
  %878 = vmatprep.subr.mxu0 0.0
  %879 = vmatpush1.msra.mxu0 0.0
  %880 = vmatprep.subr.mxu0 0.0
  %881 = vmatpush1.msra.mxu0 0.0
  %882 = vmatprep.subr.mxu0 0.0
  %883 = vmatpush1.msra.mxu0 0.0
  %884 = vmatprep.subr.mxu0 0.0
  %885 = vmatpush1.msra.mxu0 0.0
  %886 = vmatprep.subr.mxu0 0.0
  %887 = vmatpush1.msra.mxu0 0.0
  %888 = vmatprep.subr.mxu0 0.0
  %889 = vmatpush1.msra.mxu0 0.0
  %890 = vmatprep.subr.mxu0 0.0
  %891 = vmatpush1.msra.mxu0 0.0
  %892 = vmatprep.subr.mxu0 0.0
  %893 = vmatpush1.msra.mxu0 0.0
  %894 = vmatprep.subr.mxu0 0.0
  %895 = vmatpush1.msra.mxu0 0.0
  %896 = vmatprep.subr.mxu0 0.0
  %897 = vmatpush1.msra.mxu0 0.0
  %898 = vmatprep.subr.mxu0 0.0
  %899 = vmatpush1.msra.mxu0 0.0
  %900 = vmatprep.mubr.f32.mxu0 0.0
  %901 = vmatmul.mubr.f32.gmra.mrb[0].mxu0 %v834
  %v902 = vpop.f32.mrb[0].mxu0
  %v903 = vadd.f32 0.0, %v902
  %v904 = vpop.f32.mrb[0].mxu0
  %905 = vdwg.mxu0
  %v906 = vsel %vm351, %v596, 0
  %908 = vmatprep.subr.mxu0 0.0
  %909 = vmatpush1.msra.mxu0 %v20
  %910 = vmatprep.subr.mxu0 0.0
  %911 = vmatpush1.msra.mxu0 0.0
  %912 = vmatprep.subr.mxu0 0.0
  %913 = vmatpush1.msra.mxu0 0.0
  %914 = vmatprep.subr.mxu0 0.0
  %915 = vmatpush1.msra.mxu0 0.0
  %916 = vmatprep.subr.mxu0 0.0
  %917 = vmatpush1.msra.mxu0 0.0
  %918 = vmatprep.subr.mxu0 0.0
  %919 = vmatpush1.msra.mxu0 0.0
  %920 = vmatprep.subr.mxu0 0.0
  %921 = vmatpush1.msra.mxu0 0.0
  %922 = vmatprep.subr.mxu0 0.0
  %923 = vmatpush1.msra.mxu0 0.0
  %924 = vmatprep.subr.mxu0 0.0
  %925 = vmatpush1.msra.mxu0 0.0
  %926 = vmatprep.subr.mxu0 0.0
  %927 = vmatpush1.msra.mxu0 0.0
  %928 = vmatprep.subr.mxu0 0.0
  %929 = vmatpush1.msra.mxu0 0.0
  %930 = vmatprep.subr.mxu0 0.0
  %931 = vmatpush1.msra.mxu0 0.0
  %932 = vmatprep.subr.mxu0 0.0
  %933 = vmatpush1.msra.mxu0 0.0
  %934 = vmatprep.subr.mxu0 0.0
  %935 = vmatpush1.msra.mxu0 0.0
  %936 = vmatprep.subr.mxu0 0.0
  %937 = vmatpush1.msra.mxu0 0.0
  %938 = vmatprep.subr.mxu0 0.0
  %939 = vmatpush1.msra.mxu0 0.0
  %940 = vmatprep.subr.mxu0 0.0
  %941 = vmatpush1.msra.mxu0 0.0
  %942 = vmatprep.subr.mxu0 0.0
  %943 = vmatpush1.msra.mxu0 0.0
  %944 = vmatprep.subr.mxu0 0.0
  %945 = vmatpush1.msra.mxu0 0.0
  %946 = vmatprep.subr.mxu0 0.0
  %947 = vmatpush1.msra.mxu0 0.0
  %948 = vmatprep.subr.mxu0 0.0
  %949 = vmatpush1.msra.mxu0 0.0
  %950 = vmatprep.subr.mxu0 0.0
  %951 = vmatpush1.msra.mxu0 0.0
  %952 = vmatprep.subr.mxu0 0.0
  %953 = vmatpush1.msra.mxu0 0.0
  %954 = vmatprep.subr.mxu0 0.0
  %955 = vmatpush1.msra.mxu0 0.0
  %956 = vmatprep.subr.mxu0 0.0
  %957 = vmatpush1.msra.mxu0 0.0
  %958 = vmatprep.subr.mxu0 0.0
  %959 = vmatpush1.msra.mxu0 0.0
  %960 = vmatprep.subr.mxu0 0.0
  %961 = vmatpush1.msra.mxu0 0.0
  %962 = vmatprep.subr.mxu0 0.0
  %963 = vmatpush1.msra.mxu0 0.0
  %964 = vmatprep.subr.mxu0 0.0
  %965 = vmatpush1.msra.mxu0 0.0
  %966 = vmatprep.subr.mxu0 0.0
  %967 = vmatpush1.msra.mxu0 0.0
  %968 = vmatprep.subr.mxu0 0.0
  %969 = vmatpush1.msra.mxu0 0.0
  %970 = vmatprep.subr.mxu0 0.0
  %971 = vmatpush1.msra.mxu0 0.0
  %972 = vmatprep.mubr.f32.mxu0 0.0
  %973 = vmatmul.mubr.f32.gmra.mrb[0].mxu0 %v906
  %v974 = vpop.f32.mrb[0].mxu0
  %v975 = vadd.f32 0.0, %v974
  %v976 = vpop.f32.mrb[0].mxu0
  %977 = vdwg.mxu0
  %v978 = vsel %vm351, %v600, 0
  %980 = vmatprep.subr.mxu0 0.0
  %981 = vmatpush1.msra.mxu0 %v21
  %982 = vmatprep.subr.mxu0 0.0
  %983 = vmatpush1.msra.mxu0 0.0
  %984 = vmatprep.subr.mxu0 0.0
  %985 = vmatpush1.msra.mxu0 0.0
  %986 = vmatprep.subr.mxu0 0.0
  %987 = vmatpush1.msra.mxu0 0.0
  %988 = vmatprep.subr.mxu0 0.0
  %989 = vmatpush1.msra.mxu0 0.0
  %990 = vmatprep.subr.mxu0 0.0
  %991 = vmatpush1.msra.mxu0 0.0
  %992 = vmatprep.subr.mxu0 0.0
  %993 = vmatpush1.msra.mxu0 0.0
  %994 = vmatprep.subr.mxu0 0.0
  %995 = vmatpush1.msra.mxu0 0.0
  %996 = vmatprep.subr.mxu0 0.0
  %997 = vmatpush1.msra.mxu0 0.0
  %998 = vmatprep.subr.mxu0 0.0
  %999 = vmatpush1.msra.mxu0 0.0
  %1000 = vmatprep.subr.mxu0 0.0
  %1001 = vmatpush1.msra.mxu0 0.0
  %1002 = vmatprep.subr.mxu0 0.0
  %1003 = vmatpush1.msra.mxu0 0.0
  %1004 = vmatprep.subr.mxu0 0.0
  %1005 = vmatpush1.msra.mxu0 0.0
  %1006 = vmatprep.subr.mxu0 0.0
  %1007 = vmatpush1.msra.mxu0 0.0
  %1008 = vmatprep.subr.mxu0 0.0
  %1009 = vmatpush1.msra.mxu0 0.0
  %1010 = vmatprep.subr.mxu0 0.0
  %1011 = vmatpush1.msra.mxu0 0.0
  %1012 = vmatprep.subr.mxu0 0.0
  %1013 = vmatpush1.msra.mxu0 0.0
  %1014 = vmatprep.subr.mxu0 0.0
  %1015 = vmatpush1.msra.mxu0 0.0
  %1016 = vmatprep.subr.mxu0 0.0
  %1017 = vmatpush1.msra.mxu0 0.0
  %1018 = vmatprep.subr.mxu0 0.0
  %1019 = vmatpush1.msra.mxu0 0.0
  %1020 = vmatprep.subr.mxu0 0.0
  %1021 = vmatpush1.msra.mxu0 0.0
  %1022 = vmatprep.subr.mxu0 0.0
  %1023 = vmatpush1.msra.mxu0 0.0
  %1024 = vmatprep.subr.mxu0 0.0
  %1025 = vmatpush1.msra.mxu0 0.0
  %1026 = vmatprep.subr.mxu0 0.0
  %1027 = vmatpush1.msra.mxu0 0.0
  %1028 = vmatprep.subr.mxu0 0.0
  %1029 = vmatpush1.msra.mxu0 0.0
  %1030 = vmatprep.subr.mxu0 0.0
  %1031 = vmatpush1.msra.mxu0 0.0
  %1032 = vmatprep.subr.mxu0 0.0
  %1033 = vmatpush1.msra.mxu0 0.0
  %1034 = vmatprep.subr.mxu0 0.0
  %1035 = vmatpush1.msra.mxu0 0.0
  %1036 = vmatprep.subr.mxu0 0.0
  %1037 = vmatpush1.msra.mxu0 0.0
  %1038 = vmatprep.subr.mxu0 0.0
  %1039 = vmatpush1.msra.mxu0 0.0
  %1040 = vmatprep.subr.mxu0 0.0
  %1041 = vmatpush1.msra.mxu0 0.0
  %1042 = vmatprep.subr.mxu0 0.0
  %1043 = vmatpush1.msra.mxu0 0.0
  %1044 = vmatprep.mubr.f32.mxu0 0.0
  %1045 = vmatmul.mubr.f32.gmra.mrb[0].mxu0 %v978
  %v1046 = vpop.f32.mrb[0].mxu0
  %v1047 = vadd.f32 0.0, %v1046
  %v1048 = vpop.f32.mrb[0].mxu0
  %1049 = vdwg.mxu0
  %v1050 = vsel %vm351, %v604, 0
  %1052 = vmatprep.subr.mxu0 0.0
  %1053 = vmatpush1.msra.mxu0 %v22
  %1054 = vmatprep.subr.mxu0 0.0
  %1055 = vmatpush1.msra.mxu0 0.0
  %1056 = vmatprep.subr.mxu0 0.0
  %1057 = vmatpush1.msra.mxu0 0.0
  %1058 = vmatprep.subr.mxu0 0.0
  %1059 = vmatpush1.msra.mxu0 0.0
  %1060 = vmatprep.subr.mxu0 0.0
  %1061 = vmatpush1.msra.mxu0 0.0
  %1062 = vmatprep.subr.mxu0 0.0
  %1063 = vmatpush1.msra.mxu0 0.0
  %1064 = vmatprep.subr.mxu0 0.0
  %1065 = vmatpush1.msra.mxu0 0.0
  %1066 = vmatprep.subr.mxu0 0.0
  %1067 = vmatpush1.msra.mxu0 0.0
  %1068 = vmatprep.subr.mxu0 0.0
  %1069 = vmatpush1.msra.mxu0 0.0
  %1070 = vmatprep.subr.mxu0 0.0
  %1071 = vmatpush1.msra.mxu0 0.0
  %1072 = vmatprep.subr.mxu0 0.0
  %1073 = vmatpush1.msra.mxu0 0.0
  %1074 = vmatprep.subr.mxu0 0.0
  %1075 = vmatpush1.msra.mxu0 0.0
  %1076 = vmatprep.subr.mxu0 0.0
  %1077 = vmatpush1.msra.mxu0 0.0
  %1078 = vmatprep.subr.mxu0 0.0
  %1079 = vmatpush1.msra.mxu0 0.0
  %1080 = vmatprep.subr.mxu0 0.0
  %1081 = vmatpush1.msra.mxu0 0.0
  %1082 = vmatprep.subr.mxu0 0.0
  %1083 = vmatpush1.msra.mxu0 0.0
  %1084 = vmatprep.subr.mxu0 0.0
  %1085 = vmatpush1.msra.mxu0 0.0
  %1086 = vmatprep.subr.mxu0 0.0
  %1087 = vmatpush1.msra.mxu0 0.0
  %1088 = vmatprep.subr.mxu0 0.0
  %1089 = vmatpush1.msra.mxu0 0.0
  %1090 = vmatprep.subr.mxu0 0.0
  %1091 = vmatpush1.msra.mxu0 0.0
  %1092 = vmatprep.subr.mxu0 0.0
  %1093 = vmatpush1.msra.mxu0 0.0
  %1094 = vmatprep.subr.mxu0 0.0
  %1095 = vmatpush1.msra.mxu0 0.0
  %1096 = vmatprep.subr.mxu0 0.0
  %1097 = vmatpush1.msra.mxu0 0.0
  %1098 = vmatprep.subr.mxu0 0.0
  %1099 = vmatpush1.msra.mxu0 0.0
  %1100 = vmatprep.subr.mxu0 0.0
  %1101 = vmatpush1.msra.mxu0 0.0
  %1102 = vmatprep.subr.mxu0 0.0
  %1103 = vmatpush1.msra.mxu0 0.0
  %1104 = vmatprep.subr.mxu0 0.0
  %1105 = vmatpush1.msra.mxu0 0.0
  %1106 = vmatprep.subr.mxu0 0.0
  %1107 = vmatpush1.msra.mxu0 0.0
  %1108 = vmatprep.subr.mxu0 0.0
  %1109 = vmatpush1.msra.mxu0 0.0
  %1110 = vmatprep.subr.mxu0 0.0
  %1111 = vmatpush1.msra.mxu0 0.0
  %1112 = vmatprep.subr.mxu0 0.0
  %1113 = vmatpush1.msra.mxu0 0.0
  %1114 = vmatprep.subr.mxu0 0.0
  %1115 = vmatpush1.msra.mxu0 0.0
  %1116 = vmatprep.mubr.f32.mxu0 0.0
  %1117 = vmatmul.mubr.f32.gmra.mrb[0].mxu0 %v1050
  %v1118 = vpop.f32.mrb[0].mxu0
  %v1119 = vadd.f32 0.0, %v1118
  %v1120 = vpop.f32.mrb[0].mxu0
  %1121 = vdwg.mxu0
  %v1122 = vsel %vm351, %v608, 0
  %1124 = vmatprep.subr.mxu0 0.0
  %1125 = vmatpush1.msra.mxu0 %v23
  %1126 = vmatprep.subr.mxu0 0.0
  %1127 = vmatpush1.msra.mxu0 0.0
  %1128 = vmatprep.subr.mxu0 0.0
  %1129 = vmatpush1.msra.mxu0 0.0
  %1130 = vmatprep.subr.mxu0 0.0
  %1131 = vmatpush1.msra.mxu0 0.0
  %1132 = vmatprep.subr.mxu0 0.0
  %1133 = vmatpush1.msra.mxu0 0.0
  %1134 = vmatprep.subr.mxu0 0.0
  %1135 = vmatpush1.msra.mxu0 0.0
  %1136 = vmatprep.subr.mxu0 0.0
  %1137 = vmatpush1.msra.mxu0 0.0
  %1138 = vmatprep.subr.mxu0 0.0
  %1139 = vmatpush1.msra.mxu0 0.0
  %1140 = vmatprep.subr.mxu0 0.0
  %1141 = vmatpush1.msra.mxu0 0.0
  %1142 = vmatprep.subr.mxu0 0.0
  %1143 = vmatpush1.msra.mxu0 0.0
  %1144 = vmatprep.subr.mxu0 0.0
  %1145 = vmatpush1.msra.mxu0 0.0
  %1146 = vmatprep.subr.mxu0 0.0
  %1147 = vmatpush1.msra.mxu0 0.0
  %1148 = vmatprep.subr.mxu0 0.0
  %1149 = vmatpush1.msra.mxu0 0.0
  %1150 = vmatprep.subr.mxu0 0.0
  %1151 = vmatpush1.msra.mxu0 0.0
  %1152 = vmatprep.subr.mxu0 0.0
  %1153 = vmatpush1.msra.mxu0 0.0
  %1154 = vmatprep.subr.mxu0 0.0
  %1155 = vmatpush1.msra.mxu0 0.0
  %1156 = vmatprep.subr.mxu0 0.0
  %1157 = vmatpush1.msra.mxu0 0.0
  %1158 = vmatprep.subr.mxu0 0.0
  %1159 = vmatpush1.msra.mxu0 0.0
  %1160 = vmatprep.subr.mxu0 0.0
  %1161 = vmatpush1.msra.mxu0 0.0
  %1162 = vmatprep.subr.mxu0 0.0
  %1163 = vmatpush1.msra.mxu0 0.0
  %1164 = vmatprep.subr.mxu0 0.0
  %1165 = vmatpush1.msra.mxu0 0.0
  %1166 = vmatprep.subr.mxu0 0.0
  %1167 = vmatpush1.msra.mxu0 0.0
  %1168 = vmatprep.subr.mxu0 0.0
  %1169 = vmatpush1.msra.mxu0 0.0
  %1170 = vmatprep.subr.mxu0 0.0
  %1171 = vmatpush1.msra.mxu0 0.0
  %1172 = vmatprep.subr.mxu0 0.0
  %1173 = vmatpush1.msra.mxu0 0.0
  %1174 = vmatprep.subr.mxu0 0.0
  %1175 = vmatpush1.msra.mxu0 0.0
  %1176 = vmatprep.subr.mxu0 0.0
  %1177 = vmatpush1.msra.mxu0 0.0
  %1178 = vmatprep.subr.mxu0 0.0
  %1179 = vmatpush1.msra.mxu0 0.0
  %1180 = vmatprep.subr.mxu0 0.0
  %1181 = vmatpush1.msra.mxu0 0.0
  %1182 = vmatprep.subr.mxu0 0.0
  %1183 = vmatpush1.msra.mxu0 0.0
  %1184 = vmatprep.subr.mxu0 0.0
  %1185 = vmatpush1.msra.mxu0 0.0
  %1186 = vmatprep.subr.mxu0 0.0
  %1187 = vmatpush1.msra.mxu0 0.0
  %1188 = vmatprep.mubr.f32.mxu0 0.0
  %1189 = vmatmul.mubr.f32.gmra.mrb[0].mxu0 %v1122
  %v1190 = vpop.f32.mrb[0].mxu0
  %v1191 = vadd.f32 0.0, %v1190
  %v1192 = vpop.f32.mrb[0].mxu0
  %1193 = vdwg.mxu0
  %v1202 = vrot.slane %v759, 7
  %v1203 = vsel %vm336, %v1202, %v687
  %v1204 = vrot.slane %v831, 6
  %v1205 = vsel %vm338, %v1204, %v1203
  %v1206 = vrot.slane %v903, 5
  %v1207 = vsel %vm340, %v1206, %v1205
  %v1208 = vrot.slane %v975, 4
  %v1209 = vsel %vm342, %v1208, %v1207
  %v1210 = vrot.slane %v1047, 3
  %v1211 = vsel %vm344, %v1210, %v1209
  %v1212 = vrot.slane %v1119, 2
  %v1213 = vsel %vm346, %v1212, %v1211
  %v1214 = vrot.slane %v1191, 1
  %v1215 = vsel %vm348, %v1214, %v1213
  %1217 = vst.msk [vmem:[%s3] sm:$0xff] %vm28, %v1215
  // Predicated region
  $region14: #{mil_attention_forward.1} parent=0 // pred_check
    _
  $region15: #{mil_attention_forward.1} parent=0 // pred_check_branch
    %1219 = sbr.rel (0) target = $region17
  $region16: #{mil_attention_forward.1} parent=0 // pred_region
    _
  $region17: #{mil_attention_forward.1} parent=0 // pred_fallthru
    _
  // Predicated region
  $region18: #{mil_attention_forward.1} parent=0 // pred_check
    _
  $region19: #{mil_attention_forward.1} parent=0 // pred_check_branch
    %1221 = sbr.rel (0) target = $region21
  $region20: #{mil_attention_forward.1} parent=0 // pred_region
    _
  $region21: #{mil_attention_forward.1} parent=0 // pred_fallthru
    _
  // Predicated region
  $region22: #{mil_attention_forward.1} parent=0 // pred_check
    _
  $region23: #{mil_attention_forward.1} parent=0 // pred_check_branch
    %1223 = sbr.rel (0) target = $region25
  $region24: #{mil_attention_forward.1} parent=0 // pred_region
    _
  $region25: #{mil_attention_forward.1} parent=0 // pred_fallthru
    _
  // Predicated region
  $region26: #{mil_attention_forward.1} parent=0 // pred_check
    _
  $region27: #{mil_attention_forward.1} parent=0 // pred_check_branch
    %1225 = sbr.rel (0) target = $region29
  $region28: #{mil_attention_forward.1} parent=0 // pred_region
    _
  $region29: #{mil_attention_forward.1} parent=0 // pred_fallthru
    _

</llo_original>
